<compile_context>
chip_gen: v7x
topology: tpu7x:2x2x1
jax: 0.10.0
libtpu: 0.0.40
codegen_flags: <defaults>
</compile_context>

<pallas_src>
import jax
import jax.numpy as jnp
from jax.experimental import pallas as pl
from jax.experimental.pallas import tpu as pltpu

PAD = 6                 # max dilation -> symmetric halo built inside the kernel
DILS = (1, 2, 4, 6)     # dilations of the four 3-tap branches
BN_EPS = 1e-5


# ----------------------------- Pallas kernel ------------------------------ #
def _bwag_kernel(x_ref, w0_ref, w3_ref, b_ref, wout_ref, y_ref, wgt_ref):
    """Bb batch elements per grid step, NCL layout (channels on sublanes,
    length on lanes).

    x_ref   : (Bb, C, L)   bf16 input block (NCL, unpadded)
    w0_ref  : (H, C)       bf16 1x1 conv weight (BN scale folded in)
    w3_ref  : (4, H, 3C)   bf16 fused 3-tap dilated conv weights (BN folded)
    b_ref   : (5H, 1)      f32 per-channel BN shift (branch-major)
    wout_ref: (1, 5H)      f32 conv_out weight
    y_ref   : (Bb, C, L)   f32 gated output
    wgt_ref : (Bb, 1, L)   f32 attention weight
    """
    Bb, C, L = x_ref.shape
    w0 = w0_ref[...]
    w3 = w3_ref[...]
    bias = b_ref[...]
    wout = wout_ref[...]
    zpad = jnp.zeros((C, PAD), dtype=x_ref.dtype)

    for b in range(Bb):
        xb = x_ref[b]                                            # (C, L) bf16
        xp = jnp.concatenate([zpad, xb, zpad], axis=1)           # (C, L+2*PAD)
        center = xp[:, PAD:PAD + L]                              # (C, L)

        # branch 0: 1x1 conv (one matmul)
        parts = [jnp.dot(w0, center, preferred_element_type=jnp.float32)]

        # branches 1..4: dilated 3-tap convs, taps fused into one matmul each
        for j, d in enumerate(DILS):
            rhs = jnp.concatenate(
                [xp[:, PAD - d:PAD - d + L], center, xp[:, PAD + d:PAD + d + L]],
                axis=0)                                          # (3C, L)
            parts.append(jnp.dot(w3[j], rhs,
                                 preferred_element_type=jnp.float32))

        h = jnp.maximum(jnp.concatenate(parts, axis=0) + bias, 0.0)   # (5H, L)

        # fused 1x1 output conv over all 5H channels -> single (1, L) logit
        logit = jnp.dot(wout, h, preferred_element_type=jnp.float32)  # (1, L)
        w_att = jax.nn.sigmoid(logit)                                 # (1, L)

        xf = xb.astype(jnp.float32)
        y_ref[b] = (xf * (w_att + 1.0)).astype(y_ref.dtype)
        wgt_ref[b] = w_att.astype(wgt_ref.dtype)


# ------------------------------ JAX wrapper -------------------------------- #
def _pick_block_b(B, max_bb=8):
    bb = min(B, max_bb)
    while B % bb:
        bb -= 1
    return bb


def boundary_wise_attention_gate_atrous_1d(x, params, block_b=None):
    """x: (B, C, L) float32 (PyTorch NCL). Returns (feature (B,C,L), weight (B,1,L))."""
    B, C, L = x.shape
    H = params["w"][0].shape[0]

    # ---- fold BN scale into the conv weights, shift becomes a bias ---------
    scales = params["gamma"] / jnp.sqrt(params["var"] + BN_EPS)        # (5, H)
    shifts = params["beta"] - params["mean"] * scales                  # (5, H)

    w0_k = params["w"][0][:, :, 0] * scales[0][:, None]                # (H, C)
    w3_list = []
    for j in range(4):
        wj = params["w"][j + 1] * scales[j + 1][:, None, None]         # (H, C, 3)
        # contraction-dim order matches the kernel's [left, center, right] RHS
        w3_list.append(jnp.concatenate([wj[:, :, 0], wj[:, :, 1], wj[:, :, 2]],
                                       axis=1))                        # (H, 3C)
    w3_k = jnp.stack(w3_list, axis=0)                                  # (4, H, 3C)

    bias_k = shifts.reshape(5 * H, 1).astype(jnp.float32)              # (5H, 1)
    wout_k = params["wout"][:, :, 0].astype(jnp.float32)               # (1, 5H)

    # bf16 operands for the MXU; accumulation stays f32 inside the kernel.
    x_bf = x.astype(jnp.bfloat16)
    w0_k = w0_k.astype(jnp.bfloat16)
    w3_k = w3_k.astype(jnp.bfloat16)

    Bb = block_b if block_b is not None else _pick_block_b(B)
    grid = (B // Bb,)
    # TODO(synk): for very long L (or B == 1 on v7x), add an L-tile grid axis
    # with an in-kernel halo so both TensorCores get work and VMEM stays small.

    y, wgt = pl.pallas_call(
        _bwag_kernel,
        out_shape=(
            jax.ShapeDtypeStruct((B, C, L), jnp.float32),
            jax.ShapeDtypeStruct((B, 1, L), jnp.float32),
        ),
        grid=grid,
        in_specs=[
            pl.BlockSpec((Bb, C, L), lambda i: (i, 0, 0)),
            pl.BlockSpec((H, C), lambda i: (0, 0)),
            pl.BlockSpec((4, H, 3 * C), lambda i: (0, 0, 0)),
            pl.BlockSpec((5 * H, 1), lambda i: (0, 0)),
            pl.BlockSpec((1, 5 * H), lambda i: (0, 0)),
        ],
        out_specs=(
            pl.BlockSpec((Bb, C, L), lambda i: (i, 0, 0)),
            pl.BlockSpec((Bb, 1, L), lambda i: (i, 0, 0)),
        ),
        compiler_params=pltpu.CompilerParams(
            dimension_semantics=("parallel",)),
    )(x_bf, w0_k, w3_k, bias_k, wout_k)

    return y, wgt


# --------------------------- pure-JAX reference ---------------------------- #
def _conv1d(x, w, dil, pad):
    return jax.lax.conv_general_dilated(
        x, w, window_strides=(1,), padding=[(pad, pad)],
        rhs_dilation=(dil,), dimension_numbers=("NCH", "OIH", "NCH"),
        precision=jax.lax.Precision.HIGHEST)


def reference(x, params):
    cfgs = [(1, 0), (1, 1), (2, 2), (4, 4), (6, 6)]  # (dilation, padding)
    res = []
    for j, (dil, pad) in enumerate(cfgs):
        y = _conv1d(x, params["w"][j], dil, pad)
        s = params["gamma"][j] / jnp.sqrt(params["var"][j] + BN_EPS)
        y = (y - params["mean"][j][None, :, None]) * s[None, :, None] \
            + params["beta"][j][None, :, None]
        res.append(jax.nn.relu(y))
    cat = jnp.concatenate(res, axis=1)
    weight = jax.nn.sigmoid(_conv1d(cat, params["wout"], 1, 0))
    return x * weight + x, weight


# --------------------------------- main ------------------------------------ #
def make_params(key, C, H):
    ks = jax.random.split(key, 12)
    w = [jax.random.normal(ks[0], (H, C, 1), jnp.float32) * 0.3]
    for i in range(4):
        w.append(jax.random.normal(ks[1 + i], (H, C, 3), jnp.float32) * 0.3)
    gamma = 0.5 + jax.random.uniform(ks[5], (5, H), jnp.float32)
    beta = 0.1 * jax.random.normal(ks[6], (5, H), jnp.float32)
    mean = 0.1 * jax.random.normal(ks[7], (5, H), jnp.float32)
    var = 0.5 + jax.random.uniform(ks[8], (5, H), jnp.float32)
    wout = jax.random.normal(ks[9], (1, 5 * H, 1), jnp.float32) * 0.3
    return {"w": w, "gamma": gamma, "beta": beta, "mean": mean, "var": var,
            "wout": wout}


if __name__ == "__main__":
    B, C, L = 2, 4, 16
    H = C // 2  # hidden_channels default = in_channels // 2

    key = jax.random.PRNGKey(0)
    kx, kp = jax.random.split(key)
    x = jax.random.normal(kx, (B, C, L), jnp.float32)
    params = make_params(kp, C, H)

    feat, wgt = boundary_wise_attention_gate_atrous_1d(x, params)
    jax.block_until_ready((feat, wgt))

    feat_ref, wgt_ref = reference(x, params)
    assert feat.shape == (B, C, L) and wgt.shape == (B, 1, L)
    # bf16 matmul operands (f32 accumulation) -> slightly looser tolerance
    assert jnp.allclose(feat, feat_ref, atol=3e-2, rtol=3e-2), "feature mismatch"
    assert jnp.allclose(wgt, wgt_ref, atol=3e-2, rtol=3e-2), "weight mismatch"

    print("KERNEL_OK")
</pallas_src>

<mosaic_0001>
module attributes {stable_mosaic.version = 11 : i64} {
  func.func @_bwag_kernel(%arg0: i32, %arg1: memref<2x4x16xbf16, #tpu.memory_space<vmem>>, %arg2: memref<2x4xbf16, #tpu.memory_space<vmem>>, %arg3: memref<4x2x12xbf16, #tpu.memory_space<vmem>>, %arg4: memref<10x1xf32, #tpu.memory_space<vmem>>, %arg5: memref<1x10xf32, #tpu.memory_space<vmem>>, %arg6: memref<2x4x16xf32, #tpu.memory_space<vmem>>, %arg7: memref<2x1x16xf32, #tpu.memory_space<vmem>>) attributes {dimension_semantics = [#tpu.dimension_semantics<parallel>], iteration_bounds = array<i64: 1>, scalar_prefetch = 0 : i64, scratch_operands = 0 : i64, tpu.core_type = #tpu.core_type<tc>, window_params = [{transform_indices = @transform_0, window_bounds = array<i64: 2, 4, 16>}, {pipeline_mode = #tpu.pipeline_mode<synchronous>, transform_indices = @transform_1, window_bounds = array<i64: 2, 4>}, {pipeline_mode = #tpu.pipeline_mode<synchronous>, transform_indices = @transform_2, window_bounds = array<i64: 4, 2, 12>}, {pipeline_mode = #tpu.pipeline_mode<synchronous>, transform_indices = @transform_3, window_bounds = array<i64: 10, 1>}, {pipeline_mode = #tpu.pipeline_mode<synchronous>, transform_indices = @transform_4, window_bounds = array<i64: 1, 10>}, {transform_indices = @transform_5, window_bounds = array<i64: 2, 4, 16>}, {transform_indices = @transform_6, window_bounds = array<i64: 2, 1, 16>}]} {
    %c0 = arith.constant 0 : index
    %c0_0 = arith.constant 0 : index
    %0 = vector.load %arg2[%c0, %c0_0] : memref<2x4xbf16, #tpu.memory_space<vmem>>, vector<2x4xbf16>
    %c0_1 = arith.constant 0 : index
    %c0_2 = arith.constant 0 : index
    %c0_3 = arith.constant 0 : index
    %1 = vector.load %arg3[%c0_1, %c0_2, %c0_3] : memref<4x2x12xbf16, #tpu.memory_space<vmem>>, vector<4x2x12xbf16>
    %c0_4 = arith.constant 0 : index
    %c0_5 = arith.constant 0 : index
    %2 = vector.load %arg4[%c0_4, %c0_5] : memref<10x1xf32, #tpu.memory_space<vmem>>, vector<10x1xf32>
    %c0_6 = arith.constant 0 : index
    %c0_7 = arith.constant 0 : index
    %3 = vector.load %arg5[%c0_6, %c0_7] : memref<1x10xf32, #tpu.memory_space<vmem>>, vector<1x10xf32>
    %cst = arith.constant 0.000000e+00 : bf16
    %4 = vector.broadcast %cst : bf16 to vector<4x6xbf16>
    %c0_8 = arith.constant 0 : index
    %c0_9 = arith.constant 0 : index
    %c0_10 = arith.constant 0 : index
    %5 = vector.load %arg1[%c0_8, %c0_9, %c0_10] : memref<2x4x16xbf16, #tpu.memory_space<vmem>>, vector<1x4x16xbf16>
    %6 = vector.shape_cast %5 : vector<1x4x16xbf16> to vector<4x16xbf16>
    %7 = tpu.concatenate %4, %6, %4 in 1 : vector<4x6xbf16>, vector<4x16xbf16>, vector<4x6xbf16> -> vector<4x28xbf16>
    %8 = vector.extract_strided_slice %7 {offsets = [0, 6], sizes = [4, 16], strides = [1, 1]} : vector<4x28xbf16> to vector<4x16xbf16>
    %cst_11 = arith.constant dense<0.000000e+00> : vector<2x16xf32>
    %9 = tpu.matmul %0, %8, %cst_11 {dimension_numbers = #tpu.dot_dimension_numbers<[1], [0], [0], [1], [0, 0, 1, 1], [], []>} : vector<2x4xbf16>, vector<4x16xbf16>, vector<2x16xf32> -> vector<2x16xf32>
    %10 = vector.extract_strided_slice %7 {offsets = [0, 5], sizes = [4, 16], strides = [1, 1]} : vector<4x28xbf16> to vector<4x16xbf16>
    %11 = vector.extract_strided_slice %7 {offsets = [0, 7], sizes = [4, 16], strides = [1, 1]} : vector<4x28xbf16> to vector<4x16xbf16>
    %12 = tpu.concatenate %10, %8, %11 in 0 : vector<4x16xbf16>, vector<4x16xbf16>, vector<4x16xbf16> -> vector<12x16xbf16>
    %13 = vector.extract_strided_slice %1 {offsets = [0, 0, 0], sizes = [1, 2, 12], strides = [1, 1, 1]} : vector<4x2x12xbf16> to vector<1x2x12xbf16>
    %14 = vector.shape_cast %13 : vector<1x2x12xbf16> to vector<2x12xbf16>
    %cst_12 = arith.constant dense<0.000000e+00> : vector<2x16xf32>
    %15 = tpu.matmul %14, %12, %cst_12 {dimension_numbers = #tpu.dot_dimension_numbers<[1], [0], [0], [1], [0, 0, 1, 1], [], []>} : vector<2x12xbf16>, vector<12x16xbf16>, vector<2x16xf32> -> vector<2x16xf32>
    %16 = vector.extract_strided_slice %7 {offsets = [0, 4], sizes = [4, 16], strides = [1, 1]} : vector<4x28xbf16> to vector<4x16xbf16>
    %17 = vector.extract_strided_slice %7 {offsets = [0, 8], sizes = [4, 16], strides = [1, 1]} : vector<4x28xbf16> to vector<4x16xbf16>
    %18 = tpu.concatenate %16, %8, %17 in 0 : vector<4x16xbf16>, vector<4x16xbf16>, vector<4x16xbf16> -> vector<12x16xbf16>
    %19 = vector.extract_strided_slice %1 {offsets = [1, 0, 0], sizes = [1, 2, 12], strides = [1, 1, 1]} : vector<4x2x12xbf16> to vector<1x2x12xbf16>
    %20 = vector.shape_cast %19 : vector<1x2x12xbf16> to vector<2x12xbf16>
    %cst_13 = arith.constant dense<0.000000e+00> : vector<2x16xf32>
    %21 = tpu.matmul %20, %18, %cst_13 {dimension_numbers = #tpu.dot_dimension_numbers<[1], [0], [0], [1], [0, 0, 1, 1], [], []>} : vector<2x12xbf16>, vector<12x16xbf16>, vector<2x16xf32> -> vector<2x16xf32>
    %22 = vector.extract_strided_slice %7 {offsets = [0, 2], sizes = [4, 16], strides = [1, 1]} : vector<4x28xbf16> to vector<4x16xbf16>
    %23 = vector.extract_strided_slice %7 {offsets = [0, 10], sizes = [4, 16], strides = [1, 1]} : vector<4x28xbf16> to vector<4x16xbf16>
    %24 = tpu.concatenate %22, %8, %23 in 0 : vector<4x16xbf16>, vector<4x16xbf16>, vector<4x16xbf16> -> vector<12x16xbf16>
    %25 = vector.extract_strided_slice %1 {offsets = [2, 0, 0], sizes = [1, 2, 12], strides = [1, 1, 1]} : vector<4x2x12xbf16> to vector<1x2x12xbf16>
    %26 = vector.shape_cast %25 : vector<1x2x12xbf16> to vector<2x12xbf16>
    %cst_14 = arith.constant dense<0.000000e+00> : vector<2x16xf32>
    %27 = tpu.matmul %26, %24, %cst_14 {dimension_numbers = #tpu.dot_dimension_numbers<[1], [0], [0], [1], [0, 0, 1, 1], [], []>} : vector<2x12xbf16>, vector<12x16xbf16>, vector<2x16xf32> -> vector<2x16xf32>
    %28 = vector.extract_strided_slice %7 {offsets = [0, 0], sizes = [4, 16], strides = [1, 1]} : vector<4x28xbf16> to vector<4x16xbf16>
    %29 = vector.extract_strided_slice %7 {offsets = [0, 12], sizes = [4, 16], strides = [1, 1]} : vector<4x28xbf16> to vector<4x16xbf16>
    %30 = tpu.concatenate %28, %8, %29 in 0 : vector<4x16xbf16>, vector<4x16xbf16>, vector<4x16xbf16> -> vector<12x16xbf16>
    %31 = vector.extract_strided_slice %1 {offsets = [3, 0, 0], sizes = [1, 2, 12], strides = [1, 1, 1]} : vector<4x2x12xbf16> to vector<1x2x12xbf16>
    %32 = vector.shape_cast %31 : vector<1x2x12xbf16> to vector<2x12xbf16>
    %cst_15 = arith.constant dense<0.000000e+00> : vector<2x16xf32>
    %33 = tpu.matmul %32, %30, %cst_15 {dimension_numbers = #tpu.dot_dimension_numbers<[1], [0], [0], [1], [0, 0, 1, 1], [], []>} : vector<2x12xbf16>, vector<12x16xbf16>, vector<2x16xf32> -> vector<2x16xf32>
    %34 = tpu.concatenate %9, %15, %21, %27, %33 in 0 : vector<2x16xf32>, vector<2x16xf32>, vector<2x16xf32>, vector<2x16xf32>, vector<2x16xf32> -> vector<10x16xf32>
    %35 = vector.broadcast %2 : vector<10x1xf32> to vector<10x16xf32>
    %36 = arith.addf %34, %35 : vector<10x16xf32>
    %cst_16 = arith.constant 0.000000e+00 : f32
    %37 = vector.broadcast %cst_16 : f32 to vector<10x16xf32>
    %38 = arith.maximumf %36, %37 : vector<10x16xf32>
    %cst_17 = arith.constant dense<0.000000e+00> : vector<1x16xf32>
    %39 = tpu.matmul %3, %38, %cst_17 {dimension_numbers = #tpu.dot_dimension_numbers<[1], [0], [0], [1], [0, 0, 1, 1], [], []>} : vector<1x10xf32>, vector<10x16xf32>, vector<1x16xf32> -> vector<1x16xf32>
    %40 = arith.negf %39 : vector<1x16xf32>
    %41 = math.exp %40 : vector<1x16xf32>
    %cst_18 = arith.constant 1.000000e+00 : f32
    %42 = vector.broadcast %cst_18 : f32 to vector<1x16xf32>
    %43 = arith.addf %42, %41 : vector<1x16xf32>
    %44 = arith.divf %42, %43 : vector<1x16xf32>
    %45 = arith.extf %6 : vector<4x16xbf16> to vector<4x16xf32>
    %cst_19 = arith.constant 1.000000e+00 : f32
    %46 = vector.broadcast %cst_19 : f32 to vector<1x16xf32>
    %47 = arith.addf %44, %46 : vector<1x16xf32>
    %48 = vector.broadcast %47 : vector<1x16xf32> to vector<4x16xf32>
    %49 = arith.mulf %45, %48 : vector<4x16xf32>
    %c0_20 = arith.constant 0 : index
    %c0_21 = arith.constant 0 : index
    %c0_22 = arith.constant 0 : index
    %50 = vector.load %arg6[%c0_20, %c0_21, %c0_22] : memref<2x4x16xf32, #tpu.memory_space<vmem>>, vector<1x4x16xf32>
    %51 = vector.shape_cast %50 : vector<1x4x16xf32> to vector<4x16xf32>
    %52 = vector.shape_cast %49 : vector<4x16xf32> to vector<1x4x16xf32>
    tpu.vector_store %arg6[%c0_20, %c0_21, %c0_22], %52 {strides = array<i32>} : memref<2x4x16xf32, #tpu.memory_space<vmem>>, vector<1x4x16xf32>,
    %c0_23 = arith.constant 0 : index
    %c0_24 = arith.constant 0 : index
    %c0_25 = arith.constant 0 : index
    %53 = vector.load %arg7[%c0_23, %c0_24, %c0_25] : memref<2x1x16xf32, #tpu.memory_space<vmem>>, vector<1x1x16xf32>
    %54 = vector.shape_cast %53 : vector<1x1x16xf32> to vector<1x16xf32>
    %55 = vector.shape_cast %44 : vector<1x16xf32> to vector<1x1x16xf32>
    tpu.vector_store %arg7[%c0_23, %c0_24, %c0_25], %55 {strides = array<i32>} : memref<2x1x16xf32, #tpu.memory_space<vmem>>, vector<1x1x16xf32>,
    %c1 = arith.constant 1 : index
    %c0_26 = arith.constant 0 : index
    %c0_27 = arith.constant 0 : index
    %56 = vector.load %arg1[%c1, %c0_26, %c0_27] : memref<2x4x16xbf16, #tpu.memory_space<vmem>>, vector<1x4x16xbf16>
    %57 = vector.shape_cast %56 : vector<1x4x16xbf16> to vector<4x16xbf16>
    %58 = tpu.concatenate %4, %57, %4 in 1 : vector<4x6xbf16>, vector<4x16xbf16>, vector<4x6xbf16> -> vector<4x28xbf16>
    %59 = vector.extract_strided_slice %58 {offsets = [0, 6], sizes = [4, 16], strides = [1, 1]} : vector<4x28xbf16> to vector<4x16xbf16>
    %cst_28 = arith.constant dense<0.000000e+00> : vector<2x16xf32>
    %60 = tpu.matmul %0, %59, %cst_28 {dimension_numbers = #tpu.dot_dimension_numbers<[1], [0], [0], [1], [0, 0, 1, 1], [], []>} : vector<2x4xbf16>, vector<4x16xbf16>, vector<2x16xf32> -> vector<2x16xf32>
    %61 = vector.extract_strided_slice %58 {offsets = [0, 5], sizes = [4, 16], strides = [1, 1]} : vector<4x28xbf16> to vector<4x16xbf16>
    %62 = vector.extract_strided_slice %58 {offsets = [0, 7], sizes = [4, 16], strides = [1, 1]} : vector<4x28xbf16> to vector<4x16xbf16>
    %63 = tpu.concatenate %61, %59, %62 in 0 : vector<4x16xbf16>, vector<4x16xbf16>, vector<4x16xbf16> -> vector<12x16xbf16>
    %64 = vector.extract_strided_slice %1 {offsets = [0, 0, 0], sizes = [1, 2, 12], strides = [1, 1, 1]} : vector<4x2x12xbf16> to vector<1x2x12xbf16>
    %65 = vector.shape_cast %64 : vector<1x2x12xbf16> to vector<2x12xbf16>
    %cst_29 = arith.constant dense<0.000000e+00> : vector<2x16xf32>
    %66 = tpu.matmul %65, %63, %cst_29 {dimension_numbers = #tpu.dot_dimension_numbers<[1], [0], [0], [1], [0, 0, 1, 1], [], []>} : vector<2x12xbf16>, vector<12x16xbf16>, vector<2x16xf32> -> vector<2x16xf32>
    %67 = vector.extract_strided_slice %58 {offsets = [0, 4], sizes = [4, 16], strides = [1, 1]} : vector<4x28xbf16> to vector<4x16xbf16>
    %68 = vector.extract_strided_slice %58 {offsets = [0, 8], sizes = [4, 16], strides = [1, 1]} : vector<4x28xbf16> to vector<4x16xbf16>
    %69 = tpu.concatenate %67, %59, %68 in 0 : vector<4x16xbf16>, vector<4x16xbf16>, vector<4x16xbf16> -> vector<12x16xbf16>
    %70 = vector.extract_strided_slice %1 {offsets = [1, 0, 0], sizes = [1, 2, 12], strides = [1, 1, 1]} : vector<4x2x12xbf16> to vector<1x2x12xbf16>
    %71 = vector.shape_cast %70 : vector<1x2x12xbf16> to vector<2x12xbf16>
    %cst_30 = arith.constant dense<0.000000e+00> : vector<2x16xf32>
    %72 = tpu.matmul %71, %69, %cst_30 {dimension_numbers = #tpu.dot_dimension_numbers<[1], [0], [0], [1], [0, 0, 1, 1], [], []>} : vector<2x12xbf16>, vector<12x16xbf16>, vector<2x16xf32> -> vector<2x16xf32>
    %73 = vector.extract_strided_slice %58 {offsets = [0, 2], sizes = [4, 16], strides = [1, 1]} : vector<4x28xbf16> to vector<4x16xbf16>
    %74 = vector.extract_strided_slice %58 {offsets = [0, 10], sizes = [4, 16], strides = [1, 1]} : vector<4x28xbf16> to vector<4x16xbf16>
    %75 = tpu.concatenate %73, %59, %74 in 0 : vector<4x16xbf16>, vector<4x16xbf16>, vector<4x16xbf16> -> vector<12x16xbf16>
    %76 = vector.extract_strided_slice %1 {offsets = [2, 0, 0], sizes = [1, 2, 12], strides = [1, 1, 1]} : vector<4x2x12xbf16> to vector<1x2x12xbf16>
    %77 = vector.shape_cast %76 : vector<1x2x12xbf16> to vector<2x12xbf16>
    %cst_31 = arith.constant dense<0.000000e+00> : vector<2x16xf32>
    %78 = tpu.matmul %77, %75, %cst_31 {dimension_numbers = #tpu.dot_dimension_numbers<[1], [0], [0], [1], [0, 0, 1, 1], [], []>} : vector<2x12xbf16>, vector<12x16xbf16>, vector<2x16xf32> -> vector<2x16xf32>
    %79 = vector.extract_strided_slice %58 {offsets = [0, 0], sizes = [4, 16], strides = [1, 1]} : vector<4x28xbf16> to vector<4x16xbf16>
    %80 = vector.extract_strided_slice %58 {offsets = [0, 12], sizes = [4, 16], strides = [1, 1]} : vector<4x28xbf16> to vector<4x16xbf16>
    %81 = tpu.concatenate %79, %59, %80 in 0 : vector<4x16xbf16>, vector<4x16xbf16>, vector<4x16xbf16> -> vector<12x16xbf16>
    %82 = vector.extract_strided_slice %1 {offsets = [3, 0, 0], sizes = [1, 2, 12], strides = [1, 1, 1]} : vector<4x2x12xbf16> to vector<1x2x12xbf16>
    %83 = vector.shape_cast %82 : vector<1x2x12xbf16> to vector<2x12xbf16>
    %cst_32 = arith.constant dense<0.000000e+00> : vector<2x16xf32>
    %84 = tpu.matmul %83, %81, %cst_32 {dimension_numbers = #tpu.dot_dimension_numbers<[1], [0], [0], [1], [0, 0, 1, 1], [], []>} : vector<2x12xbf16>, vector<12x16xbf16>, vector<2x16xf32> -> vector<2x16xf32>
    %85 = tpu.concatenate %60, %66, %72, %78, %84 in 0 : vector<2x16xf32>, vector<2x16xf32>, vector<2x16xf32>, vector<2x16xf32>, vector<2x16xf32> -> vector<10x16xf32>
    %86 = vector.broadcast %2 : vector<10x1xf32> to vector<10x16xf32>
    %87 = arith.addf %85, %86 : vector<10x16xf32>
    %cst_33 = arith.constant 0.000000e+00 : f32
    %88 = vector.broadcast %cst_33 : f32 to vector<10x16xf32>
    %89 = arith.maximumf %87, %88 : vector<10x16xf32>
    %cst_34 = arith.constant dense<0.000000e+00> : vector<1x16xf32>
    %90 = tpu.matmul %3, %89, %cst_34 {dimension_numbers = #tpu.dot_dimension_numbers<[1], [0], [0], [1], [0, 0, 1, 1], [], []>} : vector<1x10xf32>, vector<10x16xf32>, vector<1x16xf32> -> vector<1x16xf32>
    %91 = arith.negf %90 : vector<1x16xf32>
    %92 = math.exp %91 : vector<1x16xf32>
    %cst_35 = arith.constant 1.000000e+00 : f32
    %93 = vector.broadcast %cst_35 : f32 to vector<1x16xf32>
    %94 = arith.addf %93, %92 : vector<1x16xf32>
    %95 = arith.divf %93, %94 : vector<1x16xf32>
    %96 = arith.extf %57 : vector<4x16xbf16> to vector<4x16xf32>
    %cst_36 = arith.constant 1.000000e+00 : f32
    %97 = vector.broadcast %cst_36 : f32 to vector<1x16xf32>
    %98 = arith.addf %95, %97 : vector<1x16xf32>
    %99 = vector.broadcast %98 : vector<1x16xf32> to vector<4x16xf32>
    %100 = arith.mulf %96, %99 : vector<4x16xf32>
    %c1_37 = arith.constant 1 : index
    %c0_38 = arith.constant 0 : index
    %c0_39 = arith.constant 0 : index
    %101 = vector.load %arg6[%c1_37, %c0_38, %c0_39] : memref<2x4x16xf32, #tpu.memory_space<vmem>>, vector<1x4x16xf32>
    %102 = vector.shape_cast %101 : vector<1x4x16xf32> to vector<4x16xf32>
    %103 = vector.shape_cast %100 : vector<4x16xf32> to vector<1x4x16xf32>
    tpu.vector_store %arg6[%c1_37, %c0_38, %c0_39], %103 {strides = array<i32>} : memref<2x4x16xf32, #tpu.memory_space<vmem>>, vector<1x4x16xf32>,
    %c1_40 = arith.constant 1 : index
    %c0_41 = arith.constant 0 : index
    %c0_42 = arith.constant 0 : index
    %104 = vector.load %arg7[%c1_40, %c0_41, %c0_42] : memref<2x1x16xf32, #tpu.memory_space<vmem>>, vector<1x1x16xf32>
    %105 = vector.shape_cast %104 : vector<1x1x16xf32> to vector<1x16xf32>
    %106 = vector.shape_cast %95 : vector<1x16xf32> to vector<1x1x16xf32>
    tpu.vector_store %arg7[%c1_40, %c0_41, %c0_42], %106 {strides = array<i32>} : memref<2x1x16xf32, #tpu.memory_space<vmem>>, vector<1x1x16xf32>,
    return
  }
  func.func @transform_0(%arg0: i32) -> (i32, i32, i32) {
    %c0_i32 = arith.constant 0 : i32
    %c0_i32_0 = arith.constant 0 : i32
    %c0_i32_1 = arith.constant 0 : i32
    return %arg0, %c0_i32, %c0_i32_0 : i32, i32, i32
  }
  func.func @transform_1(%arg0: i32) -> (i32, i32) {
    %c0_i32 = arith.constant 0 : i32
    %c0_i32_0 = arith.constant 0 : i32
    %c0_i32_1 = arith.constant 0 : i32
    return %c0_i32, %c0_i32_0 : i32, i32
  }
  func.func @transform_2(%arg0: i32) -> (i32, i32, i32) {
    %c0_i32 = arith.constant 0 : i32
    %c0_i32_0 = arith.constant 0 : i32
    %c0_i32_1 = arith.constant 0 : i32
    %c0_i32_2 = arith.constant 0 : i32
    return %c0_i32, %c0_i32_0, %c0_i32_1 : i32, i32, i32
  }
  func.func @transform_3(%arg0: i32) -> (i32, i32) {
    %c0_i32 = arith.constant 0 : i32
    %c0_i32_0 = arith.constant 0 : i32
    %c0_i32_1 = arith.constant 0 : i32
    return %c0_i32, %c0_i32_0 : i32, i32
  }
  func.func @transform_4(%arg0: i32) -> (i32, i32) {
    %c0_i32 = arith.constant 0 : i32
    %c0_i32_0 = arith.constant 0 : i32
    %c0_i32_1 = arith.constant 0 : i32
    return %c0_i32, %c0_i32_0 : i32, i32
  }
  func.func @transform_5(%arg0: i32) -> (i32, i32, i32) {
    %c0_i32 = arith.constant 0 : i32
    %c0_i32_0 = arith.constant 0 : i32
    %c0_i32_1 = arith.constant 0 : i32
    return %arg0, %c0_i32, %c0_i32_0 : i32, i32, i32
  }
  func.func @transform_6(%arg0: i32) -> (i32, i32, i32) {
    %c0_i32 = arith.constant 0 : i32
    %c0_i32_0 = arith.constant 0 : i32
    %c0_i32_1 = arith.constant 0 : i32
    return %arg0, %c0_i32, %c0_i32_0 : i32, i32, i32
  }
}

</mosaic_0001>

<llo_original>
// kernel: tpu_custom_call.1
$region0: #{tpu_custom_call.1}
  #allocation0 [shape = 'u32[]', space=smem, size = 0x4, offset = 0x4, fixed_abs, tag = 'smem constant byte address 0x4 - core index']
  #allocation1 [shape = 'u32[144,128]{1,0:T(1,128)}', space=vmem, size = 0x12000, scoped, tag = 'internal scratch']
  %s0 = inlined_call_operand.vmem [shape: bf16[2,4,16], index: 0, kind: input, shape index: {}]
  %s1 = inlined_call_operand.vmem [shape: bf16[2,4], index: 1, kind: input, shape index: {}]
  %s2 = inlined_call_operand.vmem [shape: bf16[4,2,12], index: 2, kind: input, shape index: {}]
  %s3 = inlined_call_operand.vmem [shape: f32[10,1], index: 3, kind: input, shape index: {}]
  %s4 = inlined_call_operand.vmem [shape: f32[1,10], index: 4, kind: input, shape index: {}]
  %s5 = inlined_call_operand.hbm [shape: f32[2,4,16], index: 5, kind: output, shape index: {0}]
  %s6 = inlined_call_operand.hbm [shape: f32[2,1,16], index: 6, kind: output, shape index: {1}]
  %7 = xla_tuple %s5, %s6
  %s8 = sld [smem:[#allocation0]]
  $region38: #{tpu_custom_call.1} parent=0
    _
  %s10 = ssub.s32 1, %s8
  %s11 = scalar_select 0, %s10, %s8
  $region1: #{tpu_custom_call.1} parent=0
    #allocation2 [shape = 'u8[4096]{0}', space=vmem, size = 0x1000, scoped, tag = 'output window, operand 0, single buffered']
    #allocation3 [shape = 's32[1]{0}', space=sflag, size = 0x4, scoped, tag = 'scoped memory for tpu_custom_call.1']
    #allocation4 [shape = 'u8[1024]{0}', space=vmem, size = 0x400, scoped, tag = 'output window, operand 1, single buffered']
    #allocation5 [shape = 's32[1]{0}', space=sflag, size = 0x4, scoped, tag = 'scoped memory for tpu_custom_call.1']
    %12 = vsyncpa [#allocation3], 0
    %13 = vsyncpa [#allocation5], 0
    // Predicated region
    $region2: #{tpu_custom_call.1} parent=1 // pred_check
      _
    $region3: #{tpu_custom_call.1} parent=1 // pred_check_branch
      %15 = sbr.rel (0) target = $region5
    $region4: #{tpu_custom_call.1} parent=1 // pred_region
      _
    $region5: #{tpu_custom_call.1} parent=1 // pred_fallthru
      _
    // Predicated region
    $region6: #{tpu_custom_call.1} parent=1 // pred_check
      _
    $region7: #{tpu_custom_call.1} parent=1 // pred_check_branch
      %17 = sbr.rel (0) target = $region9
    $region8: #{tpu_custom_call.1} parent=1 // pred_region
      _
    $region9: #{tpu_custom_call.1} parent=1 // pred_fallthru
      _
    // Predicated region
    $region10: #{tpu_custom_call.1} parent=1 // pred_check
      _
    $region11: #{tpu_custom_call.1} parent=1 // pred_check_branch
      %19 = sbr.rel (0) target = $region13
    $region12: #{tpu_custom_call.1} parent=1 // pred_region
      _
    $region13: #{tpu_custom_call.1} parent=1 // pred_fallthru
      _
    // Predicated region
    $region14: #{tpu_custom_call.1} parent=1 // pred_check
      _
    $region15: #{tpu_custom_call.1} parent=1 // pred_check_branch
      %21 = sbr.rel (0) target = $region17
    $region16: #{tpu_custom_call.1} parent=1 // pred_region
      _
    $region17: #{tpu_custom_call.1} parent=1 // pred_fallthru
      _
    // Predicated region
    $region18: #{tpu_custom_call.1} parent=1 // pred_check
      _
    $region19: #{tpu_custom_call.1} parent=1 // pred_check_branch
      %23 = sbr.rel (0) target = $region21
    $region20: #{tpu_custom_call.1} parent=1 // pred_region
      _
    $region21: #{tpu_custom_call.1} parent=1 // pred_fallthru
      _
    %v25 = vld [vmem:[%s1] sm:$0x1]
    %v26 = vld [vmem:[%s2] sm:$0x1]
    %v27 = vld [vmem:[%s2 + $0x1] sm:$0x1]
    %v28 = vld [vmem:[%s2 + $0x2] sm:$0x1]
    %v29 = vld [vmem:[%s2 + $0x3] sm:$0x1]
    %v30 = vld [vmem:[%s3] sm:$0xff]
    %v31 = vld [vmem:[%s3 + $0x8] sm:$0x3]
    %v32 = vld [vmem:[%s4] sm:$0x1]
    %v33 = vld [vmem:[%s0] sm:$0x3]
    %v36 = vunpack.c.l.s4 1983009808
    %v37 = vunpack.c.0.s8 %v36
    %v38 = vlaneseq
    %v39 = vshrl.u32 %v38, 7
    %v40 = vsub.s32 %v37, %v39
    %v41 = vrot.slane %v33, %v40
    %42 = vrot.lane.b32.xlu0 %v41, 6
    %v43 = vpop.permute.xlu0 %42
    %vm44 = vcmask 48128
    %v47 = vsel %vm44, 0, %v43
    %vm48 = vcmask 179200
    %v49 = vsel %vm48, %v47, 0
    %51 = vrot.lane.b32.xlu0 %v49, 122
    %v52 = vpop.permute.xlu0 %51
    %vm53 = vcmask 31744
    %v55 = vsel %vm53, %v25, 0
    %vm57 = vcmask 1041408
    %v59 = vsel %vm57, %v52, 0
    %61 = vmatprep.subr.bf16.mxu0 0
    %62 = vmatpush1.bf16.msra.mxu0 %v59
    %63 = vmatprep.subr.bf16.mxu0 0
    %64 = vmatpush1.bf16.msra.mxu0 0
    %65 = vmatprep.subr.bf16.mxu0 0
    %66 = vmatpush1.bf16.msra.mxu0 0
    %67 = vmatprep.subr.bf16.mxu0 0
    %68 = vmatpush1.bf16.msra.mxu0 0
    %69 = vmatprep.subr.bf16.mxu0 0
    %70 = vmatpush1.bf16.msra.mxu0 0
    %71 = vmatprep.subr.bf16.mxu0 0
    %72 = vmatpush1.bf16.msra.mxu0 0
    %73 = vmatprep.subr.bf16.mxu0 0
    %74 = vmatpush1.bf16.msra.mxu0 0
    %75 = vmatprep.subr.bf16.mxu0 0
    %76 = vmatpush1.bf16.msra.mxu0 0
    %77 = vmatprep.subr.bf16.mxu0 0
    %78 = vmatpush1.bf16.msra.mxu0 0
    %79 = vmatprep.subr.bf16.mxu0 0
    %80 = vmatpush1.bf16.msra.mxu0 0
    %81 = vmatprep.subr.bf16.mxu0 0
    %82 = vmatpush1.bf16.msra.mxu0 0
    %83 = vmatprep.subr.bf16.mxu0 0
    %84 = vmatpush1.bf16.msra.mxu0 0
    %85 = vmatprep.subr.bf16.mxu0 0
    %86 = vmatpush1.bf16.msra.mxu0 0
    %87 = vmatprep.subr.bf16.mxu0 0
    %88 = vmatpush1.bf16.msra.mxu0 0
    %89 = vmatprep.subr.bf16.mxu0 0
    %90 = vmatpush1.bf16.msra.mxu0 0
    %91 = vmatprep.subr.bf16.mxu0 0
    %92 = vmatpush1.bf16.msra.mxu0 0
    %93 = vmatprep.mubr.bf16.mxu0 0
    %94 = vmatmul.mubr.bf16.gmra.mrb[0].mxu0 %v55
    %v95 = vpop.f32.mrb[0].mxu0
    %v96 = vadd.f32 0.0, %v95
    %v97 = vpop.f32.mrb[0].mxu0
    %v98 = vpop.f32.mrb[0].mxu0
    %v99 = vpop.f32.mrb[0].mxu0
    %100 = vdwg.mxu0
    %v101 = vrot.slane %v49, 6
    %102 = vrot.lane.b32.xlu0 %v101, 127
    %v103 = vpop.permute.xlu0 %102
    %v104 = vrot.slane %v49, 4
    %105 = vrot.lane.b32.xlu0 %v104, 126
    %v106 = vpop.permute.xlu0 %105
    %v108 = vsel %vm57, %v49, %v103
    %vm109 = vcmask 1043456
    %v111 = vsel %vm109, %v108, %v106
    %113 = vrot.lane.b32.xlu0 %v111, 123
    %v114 = vpop.permute.xlu0 %113
    %vm115 = vcmask 97280
    %v117 = vsel %vm115, %v26, 0
    %vm119 = vcmask 1045504
    %v121 = vsel %vm119, %v114, 0
    %123 = vmatprep.subr.bf16.mxu0 0
    %124 = vmatpush1.bf16.msra.mxu0 %v121
    %125 = vmatprep.subr.bf16.mxu0 0
    %126 = vmatpush1.bf16.msra.mxu0 0
    %127 = vmatprep.subr.bf16.mxu0 0
    %128 = vmatpush1.bf16.msra.mxu0 0
    %129 = vmatprep.subr.bf16.mxu0 0
    %130 = vmatpush1.bf16.msra.mxu0 0
    %131 = vmatprep.subr.bf16.mxu0 0
    %132 = vmatpush1.bf16.msra.mxu0 0
    %133 = vmatprep.subr.bf16.mxu0 0
    %134 = vmatpush1.bf16.msra.mxu0 0
    %135 = vmatprep.subr.bf16.mxu0 0
    %136 = vmatpush1.bf16.msra.mxu0 0
    %137 = vmatprep.subr.bf16.mxu0 0
    %138 = vmatpush1.bf16.msra.mxu0 0
    %139 = vmatprep.subr.bf16.mxu0 0
    %140 = vmatpush1.bf16.msra.mxu0 0
    %141 = vmatprep.subr.bf16.mxu0 0
    %142 = vmatpush1.bf16.msra.mxu0 0
    %143 = vmatprep.subr.bf16.mxu0 0
    %144 = vmatpush1.bf16.msra.mxu0 0
    %145 = vmatprep.subr.bf16.mxu0 0
    %146 = vmatpush1.bf16.msra.mxu0 0
    %147 = vmatprep.subr.bf16.mxu0 0
    %148 = vmatpush1.bf16.msra.mxu0 0
    %149 = vmatprep.subr.bf16.mxu0 0
    %150 = vmatpush1.bf16.msra.mxu0 0
    %151 = vmatprep.subr.bf16.mxu0 0
    %152 = vmatpush1.bf16.msra.mxu0 0
    %153 = vmatprep.subr.bf16.mxu0 0
    %154 = vmatpush1.bf16.msra.mxu0 0
    %155 = vmatprep.mubr.bf16.mxu0 0
    %156 = vmatmul.mubr.bf16.gmra.mrb[0].mxu0 %v117
    %v157 = vpop.f32.mrb[0].mxu0
    %v158 = vadd.f32 0.0, %v157
    %v159 = vpop.f32.mrb[0].mxu0
    %v160 = vpop.f32.mrb[0].mxu0
    %v161 = vpop.f32.mrb[0].mxu0
    %162 = vdwg.mxu0
    %163 = vrot.lane.b32.xlu0 %v101, 126
    %v164 = vpop.permute.xlu0 %163
    %165 = vrot.lane.b32.xlu0 %v104, 124
    %v166 = vpop.permute.xlu0 %165
    %v168 = vsel %vm57, %v49, %v164
    %v170 = vsel %vm109, %v168, %v166
    %172 = vrot.lane.b32.xlu0 %v170, 124
    %v173 = vpop.permute.xlu0 %172
    %v175 = vsel %vm115, %v27, 0
    %v178 = vsel %vm119, %v173, 0
    %180 = vmatprep.subr.bf16.mxu0 0
    %181 = vmatpush1.bf16.msra.mxu0 %v178
    %182 = vmatprep.subr.bf16.mxu0 0
    %183 = vmatpush1.bf16.msra.mxu0 0
    %184 = vmatprep.subr.bf16.mxu0 0
    %185 = vmatpush1.bf16.msra.mxu0 0
    %186 = vmatprep.subr.bf16.mxu0 0
    %187 = vmatpush1.bf16.msra.mxu0 0
    %188 = vmatprep.subr.bf16.mxu0 0
    %189 = vmatpush1.bf16.msra.mxu0 0
    %190 = vmatprep.subr.bf16.mxu0 0
    %191 = vmatpush1.bf16.msra.mxu0 0
    %192 = vmatprep.subr.bf16.mxu0 0
    %193 = vmatpush1.bf16.msra.mxu0 0
    %194 = vmatprep.subr.bf16.mxu0 0
    %195 = vmatpush1.bf16.msra.mxu0 0
    %196 = vmatprep.subr.bf16.mxu0 0
    %197 = vmatpush1.bf16.msra.mxu0 0
    %198 = vmatprep.subr.bf16.mxu0 0
    %199 = vmatpush1.bf16.msra.mxu0 0
    %200 = vmatprep.subr.bf16.mxu0 0
    %201 = vmatpush1.bf16.msra.mxu0 0
    %202 = vmatprep.subr.bf16.mxu0 0
    %203 = vmatpush1.bf16.msra.mxu0 0
    %204 = vmatprep.subr.bf16.mxu0 0
    %205 = vmatpush1.bf16.msra.mxu0 0
    %206 = vmatprep.subr.bf16.mxu0 0
    %207 = vmatpush1.bf16.msra.mxu0 0
    %208 = vmatprep.subr.bf16.mxu0 0
    %209 = vmatpush1.bf16.msra.mxu0 0
    %210 = vmatprep.subr.bf16.mxu0 0
    %211 = vmatpush1.bf16.msra.mxu0 0
    %212 = vmatprep.mubr.bf16.mxu0 0
    %213 = vmatmul.mubr.bf16.gmra.mrb[0].mxu0 %v175
    %v214 = vpop.f32.mrb[0].mxu0
    %v215 = vadd.f32 0.0, %v214
    %v216 = vpop.f32.mrb[0].mxu0
    %v217 = vpop.f32.mrb[0].mxu0
    %v218 = vpop.f32.mrb[0].mxu0
    %219 = vdwg.mxu0
    %220 = vrot.lane.b32.xlu0 %v101, 124
    %v221 = vpop.permute.xlu0 %220
    %222 = vrot.lane.b32.xlu0 %v104, 120
    %v223 = vpop.permute.xlu0 %222
    %v225 = vsel %vm57, %v49, %v221
    %v227 = vsel %vm109, %v225, %v223
    %229 = vrot.lane.b32.xlu0 %v227, 126
    %v230 = vpop.permute.xlu0 %229
    %v232 = vsel %vm115, %v28, 0
    %v235 = vsel %vm119, %v230, 0
    %237 = vmatprep.subr.bf16.mxu0 0
    %238 = vmatpush1.bf16.msra.mxu0 %v235
    %239 = vmatprep.subr.bf16.mxu0 0
    %240 = vmatpush1.bf16.msra.mxu0 0
    %241 = vmatprep.subr.bf16.mxu0 0
    %242 = vmatpush1.bf16.msra.mxu0 0
    %243 = vmatprep.subr.bf16.mxu0 0
    %244 = vmatpush1.bf16.msra.mxu0 0
    %245 = vmatprep.subr.bf16.mxu0 0
    %246 = vmatpush1.bf16.msra.mxu0 0
    %247 = vmatprep.subr.bf16.mxu0 0
    %248 = vmatpush1.bf16.msra.mxu0 0
    %249 = vmatprep.subr.bf16.mxu0 0
    %250 = vmatpush1.bf16.msra.mxu0 0
    %251 = vmatprep.subr.bf16.mxu0 0
    %252 = vmatpush1.bf16.msra.mxu0 0
    %253 = vmatprep.subr.bf16.mxu0 0
    %254 = vmatpush1.bf16.msra.mxu0 0
    %255 = vmatprep.subr.bf16.mxu0 0
    %256 = vmatpush1.bf16.msra.mxu0 0
    %257 = vmatprep.subr.bf16.mxu0 0
    %258 = vmatpush1.bf16.msra.mxu0 0
    %259 = vmatprep.subr.bf16.mxu0 0
    %260 = vmatpush1.bf16.msra.mxu0 0
    %261 = vmatprep.subr.bf16.mxu0 0
    %262 = vmatpush1.bf16.msra.mxu0 0
    %263 = vmatprep.subr.bf16.mxu0 0
    %264 = vmatpush1.bf16.msra.mxu0 0
    %265 = vmatprep.subr.bf16.mxu0 0
    %266 = vmatpush1.bf16.msra.mxu0 0
    %267 = vmatprep.subr.bf16.mxu0 0
    %268 = vmatpush1.bf16.msra.mxu0 0
    %269 = vmatprep.mubr.bf16.mxu0 0
    %270 = vmatmul.mubr.bf16.gmra.mrb[0].mxu0 %v232
    %v271 = vpop.f32.mrb[0].mxu0
    %v272 = vadd.f32 0.0, %v271
    %v273 = vpop.f32.mrb[0].mxu0
    %v274 = vpop.f32.mrb[0].mxu0
    %v275 = vpop.f32.mrb[0].mxu0
    %276 = vdwg.mxu0
    %277 = vrot.lane.b32.xlu0 %v101, 122
    %v278 = vpop.permute.xlu0 %277
    %279 = vrot.lane.b32.xlu0 %v104, 116
    %v280 = vpop.permute.xlu0 %279
    %v282 = vsel %vm57, %v49, %v278
    %v284 = vsel %vm109, %v282, %v280
    %v286 = vsel %vm115, %v29, 0
    %v288 = vsel %vm119, %v284, 0
    %290 = vmatprep.subr.bf16.mxu0 0
    %291 = vmatpush1.bf16.msra.mxu0 %v288
    %292 = vmatprep.subr.bf16.mxu0 0
    %293 = vmatpush1.bf16.msra.mxu0 0
    %294 = vmatprep.subr.bf16.mxu0 0
    %295 = vmatpush1.bf16.msra.mxu0 0
    %296 = vmatprep.subr.bf16.mxu0 0
    %297 = vmatpush1.bf16.msra.mxu0 0
    %298 = vmatprep.subr.bf16.mxu0 0
    %299 = vmatpush1.bf16.msra.mxu0 0
    %300 = vmatprep.subr.bf16.mxu0 0
    %301 = vmatpush1.bf16.msra.mxu0 0
    %302 = vmatprep.subr.bf16.mxu0 0
    %303 = vmatpush1.bf16.msra.mxu0 0
    %304 = vmatprep.subr.bf16.mxu0 0
    %305 = vmatpush1.bf16.msra.mxu0 0
    %306 = vmatprep.subr.bf16.mxu0 0
    %307 = vmatpush1.bf16.msra.mxu0 0
    %308 = vmatprep.subr.bf16.mxu0 0
    %309 = vmatpush1.bf16.msra.mxu0 0
    %310 = vmatprep.subr.bf16.mxu0 0
    %311 = vmatpush1.bf16.msra.mxu0 0
    %312 = vmatprep.subr.bf16.mxu0 0
    %313 = vmatpush1.bf16.msra.mxu0 0
    %314 = vmatprep.subr.bf16.mxu0 0
    %315 = vmatpush1.bf16.msra.mxu0 0
    %316 = vmatprep.subr.bf16.mxu0 0
    %317 = vmatpush1.bf16.msra.mxu0 0
    %318 = vmatprep.subr.bf16.mxu0 0
    %319 = vmatpush1.bf16.msra.mxu0 0
    %320 = vmatprep.subr.bf16.mxu0 0
    %321 = vmatpush1.bf16.msra.mxu0 0
    %322 = vmatprep.mubr.bf16.mxu0 0
    %323 = vmatmul.mubr.bf16.gmra.mrb[0].mxu0 %v286
    %v324 = vpop.f32.mrb[0].mxu0
    %v325 = vadd.f32 0.0, %v324
    %v326 = vpop.f32.mrb[0].mxu0
    %v327 = vpop.f32.mrb[0].mxu0
    %v328 = vpop.f32.mrb[0].mxu0
    %329 = vdwg.mxu0
    %v331 = vrot.slane %v158, 6
    %v334 = vrot.slane %v215, 4
    %v337 = vrot.slane %v272, 2
    %v339 = vsel %vm57, %v96, %v331
    %v340 = vsel %vm109, %v339, %v334
    %v341 = vsel %vm119, %v340, %v337
    %343 = vset.pattern.permute.xlu0 0
    %344 = vperm.xlu0 %343, %v30
    %v345 = vpop.permute.xlu0 %344
    %348 = vset.pattern.permute.xlu0 0
    %349 = vperm.xlu0 %348, %v31
    %v350 = vpop.permute.xlu0 %349
    %v352 = vadd.f32 %v341, %v345
    %v353 = vadd.f32 %v325, %v350
    %v354 = vmax.f32 %v352, 0.0
    %v355 = vmax.f32 %v353, 0.0
    %vm356 = vcmask 80896
    %v358 = vsel %vm356, %v32, 0
    %v361 = vsel %vm57, %v355, 0
    %363 = vmatprep.subr.mxu0 0.0
    %364 = vmatpush1.msra.mxu0 %v354
    %365 = vmatprep.subr.mxu0 0.0
    %366 = vmatpush1.msra.mxu0 %v361
    %367 = vmatprep.subr.mxu0 0.0
    %368 = vmatpush1.msra.mxu0 0.0
    %369 = vmatprep.subr.mxu0 0.0
    %370 = vmatpush1.msra.mxu0 0.0
    %371 = vmatprep.subr.mxu0 0.0
    %372 = vmatpush1.msra.mxu0 0.0
    %373 = vmatprep.subr.mxu0 0.0
    %374 = vmatpush1.msra.mxu0 0.0
    %375 = vmatprep.subr.mxu0 0.0
    %376 = vmatpush1.msra.mxu0 0.0
    %377 = vmatprep.subr.mxu0 0.0
    %378 = vmatpush1.msra.mxu0 0.0
    %379 = vmatprep.subr.mxu0 0.0
    %380 = vmatpush1.msra.mxu0 0.0
    %381 = vmatprep.subr.mxu0 0.0
    %382 = vmatpush1.msra.mxu0 0.0
    %383 = vmatprep.subr.mxu0 0.0
    %384 = vmatpush1.msra.mxu0 0.0
    %385 = vmatprep.subr.mxu0 0.0
    %386 = vmatpush1.msra.mxu0 0.0
    %387 = vmatprep.subr.mxu0 0.0
    %388 = vmatpush1.msra.mxu0 0.0
    %389 = vmatprep.subr.mxu0 0.0
    %390 = vmatpush1.msra.mxu0 0.0
    %391 = vmatprep.subr.mxu0 0.0
    %392 = vmatpush1.msra.mxu0 0.0
    %393 = vmatprep.subr.mxu0 0.0
    %394 = vmatpush1.msra.mxu0 0.0
    %395 = vmatprep.subr.mxu0 0.0
    %396 = vmatpush1.msra.mxu0 0.0
    %397 = vmatprep.subr.mxu0 0.0
    %398 = vmatpush1.msra.mxu0 0.0
    %399 = vmatprep.subr.mxu0 0.0
    %400 = vmatpush1.msra.mxu0 0.0
    %401 = vmatprep.subr.mxu0 0.0
    %402 = vmatpush1.msra.mxu0 0.0
    %403 = vmatprep.subr.mxu0 0.0
    %404 = vmatpush1.msra.mxu0 0.0
    %405 = vmatprep.subr.mxu0 0.0
    %406 = vmatpush1.msra.mxu0 0.0
    %407 = vmatprep.subr.mxu0 0.0
    %408 = vmatpush1.msra.mxu0 0.0
    %409 = vmatprep.subr.mxu0 0.0
    %410 = vmatpush1.msra.mxu0 0.0
    %411 = vmatprep.subr.mxu0 0.0
    %412 = vmatpush1.msra.mxu0 0.0
    %413 = vmatprep.subr.mxu0 0.0
    %414 = vmatpush1.msra.mxu0 0.0
    %415 = vmatprep.subr.mxu0 0.0
    %416 = vmatpush1.msra.mxu0 0.0
    %417 = vmatprep.subr.mxu0 0.0
    %418 = vmatpush1.msra.mxu0 0.0
    %419 = vmatprep.subr.mxu0 0.0
    %420 = vmatpush1.msra.mxu0 0.0
    %421 = vmatprep.subr.mxu0 0.0
    %422 = vmatpush1.msra.mxu0 0.0
    %423 = vmatprep.subr.mxu0 0.0
    %424 = vmatpush1.msra.mxu0 0.0
    %425 = vmatprep.subr.mxu0 0.0
    %426 = vmatpush1.msra.mxu0 0.0
    %427 = vmatprep.mubr.f32.mxu0 0.0
    %428 = vmatmul.mubr.f32.gmra.mrb[0].mxu0 %v358
    %v429 = vpop.f32.mrb[0].mxu0
    %v430 = vadd.f32 0.0, %v429
    %v431 = vpop.f32.mrb[0].mxu0
    %432 = vdwg.mxu0
    %v433 = vxor.u32 %v430, 2147483648
    %v434 = vmul.f32 %v433, 1.442695
    %v435 = vpow.pop %v434
    %v436 = vadd.f32 %v435, 1.0
    %v437 = vrcp.pop %v436
    %v438 = vmul.f32 1.0, %v437
    %v439 = vunpack.c.l.bf16 %v33
    %v440 = vadd.f32 %v438, 1.0
    %v441 = vlaneseq
    %v442 = vshrl.u32 %v441, 7
    %v443 = vsub.s32 0, %v442
    %v444 = vrot.slane %v440, %v443
    %v445 = vmul.f32 %v439, %v444
    %vm446 = vcmask 125952
    %447 = vst.msk [vmem:[#allocation2] sm:$0xf] %vm446, %v445
    %vm448 = vcmask 122880
    %449 = vst.msk [vmem:[#allocation4] sm:$0x1] %vm448, %v438
    %s450 = scalar_lea.vmem %s0, 2
    %v451 = vld [vmem:[%s450] sm:$0x3]
    %v454 = vunpack.c.l.s4 1983009808
    %v455 = vunpack.c.0.s8 %v454
    %v456 = vlaneseq
    %v457 = vshrl.u32 %v456, 7
    %v458 = vsub.s32 %v455, %v457
    %v459 = vrot.slane %v451, %v458
    %460 = vrot.lane.b32.xlu0 %v459, 6
    %v461 = vpop.permute.xlu0 %460
    %v463 = vsel %vm44, 0, %v461
    %v464 = vsel %vm48, %v463, 0
    %466 = vrot.lane.b32.xlu0 %v464, 122
    %v467 = vpop.permute.xlu0 %466
    %v469 = vsel %vm57, %v467, 0
    %471 = vmatprep.subr.bf16.mxu0 0
    %472 = vmatpush1.bf16.msra.mxu0 %v469
    %473 = vmatprep.subr.bf16.mxu0 0
    %474 = vmatpush1.bf16.msra.mxu0 0
    %475 = vmatprep.subr.bf16.mxu0 0
    %476 = vmatpush1.bf16.msra.mxu0 0
    %477 = vmatprep.subr.bf16.mxu0 0
    %478 = vmatpush1.bf16.msra.mxu0 0
    %479 = vmatprep.subr.bf16.mxu0 0
    %480 = vmatpush1.bf16.msra.mxu0 0
    %481 = vmatprep.subr.bf16.mxu0 0
    %482 = vmatpush1.bf16.msra.mxu0 0
    %483 = vmatprep.subr.bf16.mxu0 0
    %484 = vmatpush1.bf16.msra.mxu0 0
    %485 = vmatprep.subr.bf16.mxu0 0
    %486 = vmatpush1.bf16.msra.mxu0 0
    %487 = vmatprep.subr.bf16.mxu0 0
    %488 = vmatpush1.bf16.msra.mxu0 0
    %489 = vmatprep.subr.bf16.mxu0 0
    %490 = vmatpush1.bf16.msra.mxu0 0
    %491 = vmatprep.subr.bf16.mxu0 0
    %492 = vmatpush1.bf16.msra.mxu0 0
    %493 = vmatprep.subr.bf16.mxu0 0
    %494 = vmatpush1.bf16.msra.mxu0 0
    %495 = vmatprep.subr.bf16.mxu0 0
    %496 = vmatpush1.bf16.msra.mxu0 0
    %497 = vmatprep.subr.bf16.mxu0 0
    %498 = vmatpush1.bf16.msra.mxu0 0
    %499 = vmatprep.subr.bf16.mxu0 0
    %500 = vmatpush1.bf16.msra.mxu0 0
    %501 = vmatprep.subr.bf16.mxu0 0
    %502 = vmatpush1.bf16.msra.mxu0 0
    %503 = vmatprep.mubr.bf16.mxu0 0
    %504 = vmatmul.mubr.bf16.gmra.mrb[0].mxu0 %v55
    %v505 = vpop.f32.mrb[0].mxu0
    %v506 = vadd.f32 0.0, %v505
    %v507 = vpop.f32.mrb[0].mxu0
    %v508 = vpop.f32.mrb[0].mxu0
    %v509 = vpop.f32.mrb[0].mxu0
    %510 = vdwg.mxu0
    %v511 = vrot.slane %v464, 6
    %512 = vrot.lane.b32.xlu0 %v511, 127
    %v513 = vpop.permute.xlu0 %512
    %v514 = vrot.slane %v464, 4
    %515 = vrot.lane.b32.xlu0 %v514, 126
    %v516 = vpop.permute.xlu0 %515
    %v518 = vsel %vm57, %v464, %v513
    %v520 = vsel %vm109, %v518, %v516
    %522 = vrot.lane.b32.xlu0 %v520, 123
    %v523 = vpop.permute.xlu0 %522
    %v525 = vsel %vm119, %v523, 0
    %527 = vmatprep.subr.bf16.mxu0 0
    %528 = vmatpush1.bf16.msra.mxu0 %v525
    %529 = vmatprep.subr.bf16.mxu0 0
    %530 = vmatpush1.bf16.msra.mxu0 0
    %531 = vmatprep.subr.bf16.mxu0 0
    %532 = vmatpush1.bf16.msra.mxu0 0
    %533 = vmatprep.subr.bf16.mxu0 0
    %534 = vmatpush1.bf16.msra.mxu0 0
    %535 = vmatprep.subr.bf16.mxu0 0
    %536 = vmatpush1.bf16.msra.mxu0 0
    %537 = vmatprep.subr.bf16.mxu0 0
    %538 = vmatpush1.bf16.msra.mxu0 0
    %539 = vmatprep.subr.bf16.mxu0 0
    %540 = vmatpush1.bf16.msra.mxu0 0
    %541 = vmatprep.subr.bf16.mxu0 0
    %542 = vmatpush1.bf16.msra.mxu0 0
    %543 = vmatprep.subr.bf16.mxu0 0
    %544 = vmatpush1.bf16.msra.mxu0 0
    %545 = vmatprep.subr.bf16.mxu0 0
    %546 = vmatpush1.bf16.msra.mxu0 0
    %547 = vmatprep.subr.bf16.mxu0 0
    %548 = vmatpush1.bf16.msra.mxu0 0
    %549 = vmatprep.subr.bf16.mxu0 0
    %550 = vmatpush1.bf16.msra.mxu0 0
    %551 = vmatprep.subr.bf16.mxu0 0
    %552 = vmatpush1.bf16.msra.mxu0 0
    %553 = vmatprep.subr.bf16.mxu0 0
    %554 = vmatpush1.bf16.msra.mxu0 0
    %555 = vmatprep.subr.bf16.mxu0 0
    %556 = vmatpush1.bf16.msra.mxu0 0
    %557 = vmatprep.subr.bf16.mxu0 0
    %558 = vmatpush1.bf16.msra.mxu0 0
    %559 = vmatprep.mubr.bf16.mxu0 0
    %560 = vmatmul.mubr.bf16.gmra.mrb[0].mxu0 %v117
    %v561 = vpop.f32.mrb[0].mxu0
    %v562 = vadd.f32 0.0, %v561
    %v563 = vpop.f32.mrb[0].mxu0
    %v564 = vpop.f32.mrb[0].mxu0
    %v565 = vpop.f32.mrb[0].mxu0
    %566 = vdwg.mxu0
    %567 = vrot.lane.b32.xlu0 %v511, 126
    %v568 = vpop.permute.xlu0 %567
    %569 = vrot.lane.b32.xlu0 %v514, 124
    %v570 = vpop.permute.xlu0 %569
    %v572 = vsel %vm57, %v464, %v568
    %v574 = vsel %vm109, %v572, %v570
    %576 = vrot.lane.b32.xlu0 %v574, 124
    %v577 = vpop.permute.xlu0 %576
    %v579 = vsel %vm119, %v577, 0
    %581 = vmatprep.subr.bf16.mxu0 0
    %582 = vmatpush1.bf16.msra.mxu0 %v579
    %583 = vmatprep.subr.bf16.mxu0 0
    %584 = vmatpush1.bf16.msra.mxu0 0
    %585 = vmatprep.subr.bf16.mxu0 0
    %586 = vmatpush1.bf16.msra.mxu0 0
    %587 = vmatprep.subr.bf16.mxu0 0
    %588 = vmatpush1.bf16.msra.mxu0 0
    %589 = vmatprep.subr.bf16.mxu0 0
    %590 = vmatpush1.bf16.msra.mxu0 0
    %591 = vmatprep.subr.bf16.mxu0 0
    %592 = vmatpush1.bf16.msra.mxu0 0
    %593 = vmatprep.subr.bf16.mxu0 0
    %594 = vmatpush1.bf16.msra.mxu0 0
    %595 = vmatprep.subr.bf16.mxu0 0
    %596 = vmatpush1.bf16.msra.mxu0 0
    %597 = vmatprep.subr.bf16.mxu0 0
    %598 = vmatpush1.bf16.msra.mxu0 0
    %599 = vmatprep.subr.bf16.mxu0 0
    %600 = vmatpush1.bf16.msra.mxu0 0
    %601 = vmatprep.subr.bf16.mxu0 0
    %602 = vmatpush1.bf16.msra.mxu0 0
    %603 = vmatprep.subr.bf16.mxu0 0
    %604 = vmatpush1.bf16.msra.mxu0 0
    %605 = vmatprep.subr.bf16.mxu0 0
    %606 = vmatpush1.bf16.msra.mxu0 0
    %607 = vmatprep.subr.bf16.mxu0 0
    %608 = vmatpush1.bf16.msra.mxu0 0
    %609 = vmatprep.subr.bf16.mxu0 0
    %610 = vmatpush1.bf16.msra.mxu0 0
    %611 = vmatprep.subr.bf16.mxu0 0
    %612 = vmatpush1.bf16.msra.mxu0 0
    %613 = vmatprep.mubr.bf16.mxu0 0
    %614 = vmatmul.mubr.bf16.gmra.mrb[0].mxu0 %v175
    %v615 = vpop.f32.mrb[0].mxu0
    %v616 = vadd.f32 0.0, %v615
    %v617 = vpop.f32.mrb[0].mxu0
    %v618 = vpop.f32.mrb[0].mxu0
    %v619 = vpop.f32.mrb[0].mxu0
    %620 = vdwg.mxu0
    %621 = vrot.lane.b32.xlu0 %v511, 124
    %v622 = vpop.permute.xlu0 %621
    %623 = vrot.lane.b32.xlu0 %v514, 120
    %v624 = vpop.permute.xlu0 %623
    %v626 = vsel %vm57, %v464, %v622
    %v628 = vsel %vm109, %v626, %v624
    %630 = vrot.lane.b32.xlu0 %v628, 126
    %v631 = vpop.permute.xlu0 %630
    %v633 = vsel %vm119, %v631, 0
    %635 = vmatprep.subr.bf16.mxu0 0
    %636 = vmatpush1.bf16.msra.mxu0 %v633
    %637 = vmatprep.subr.bf16.mxu0 0
    %638 = vmatpush1.bf16.msra.mxu0 0
    %639 = vmatprep.subr.bf16.mxu0 0
    %640 = vmatpush1.bf16.msra.mxu0 0
    %641 = vmatprep.subr.bf16.mxu0 0
    %642 = vmatpush1.bf16.msra.mxu0 0
    %643 = vmatprep.subr.bf16.mxu0 0
    %644 = vmatpush1.bf16.msra.mxu0 0
    %645 = vmatprep.subr.bf16.mxu0 0
    %646 = vmatpush1.bf16.msra.mxu0 0
    %647 = vmatprep.subr.bf16.mxu0 0
    %648 = vmatpush1.bf16.msra.mxu0 0
    %649 = vmatprep.subr.bf16.mxu0 0
    %650 = vmatpush1.bf16.msra.mxu0 0
    %651 = vmatprep.subr.bf16.mxu0 0
    %652 = vmatpush1.bf16.msra.mxu0 0
    %653 = vmatprep.subr.bf16.mxu0 0
    %654 = vmatpush1.bf16.msra.mxu0 0
    %655 = vmatprep.subr.bf16.mxu0 0
    %656 = vmatpush1.bf16.msra.mxu0 0
    %657 = vmatprep.subr.bf16.mxu0 0
    %658 = vmatpush1.bf16.msra.mxu0 0
    %659 = vmatprep.subr.bf16.mxu0 0
    %660 = vmatpush1.bf16.msra.mxu0 0
    %661 = vmatprep.subr.bf16.mxu0 0
    %662 = vmatpush1.bf16.msra.mxu0 0
    %663 = vmatprep.subr.bf16.mxu0 0
    %664 = vmatpush1.bf16.msra.mxu0 0
    %665 = vmatprep.subr.bf16.mxu0 0
    %666 = vmatpush1.bf16.msra.mxu0 0
    %667 = vmatprep.mubr.bf16.mxu0 0
    %668 = vmatmul.mubr.bf16.gmra.mrb[0].mxu0 %v232
    %v669 = vpop.f32.mrb[0].mxu0
    %v670 = vadd.f32 0.0, %v669
    %v671 = vpop.f32.mrb[0].mxu0
    %v672 = vpop.f32.mrb[0].mxu0
    %v673 = vpop.f32.mrb[0].mxu0
    %674 = vdwg.mxu0
    %675 = vrot.lane.b32.xlu0 %v511, 122
    %v676 = vpop.permute.xlu0 %675
    %677 = vrot.lane.b32.xlu0 %v514, 116
    %v678 = vpop.permute.xlu0 %677
    %v680 = vsel %vm57, %v464, %v676
    %v682 = vsel %vm109, %v680, %v678
    %v683 = vsel %vm119, %v682, 0
    %685 = vmatprep.subr.bf16.mxu0 0
    %686 = vmatpush1.bf16.msra.mxu0 %v683
    %687 = vmatprep.subr.bf16.mxu0 0
    %688 = vmatpush1.bf16.msra.mxu0 0
    %689 = vmatprep.subr.bf16.mxu0 0
    %690 = vmatpush1.bf16.msra.mxu0 0
    %691 = vmatprep.subr.bf16.mxu0 0
    %692 = vmatpush1.bf16.msra.mxu0 0
    %693 = vmatprep.subr.bf16.mxu0 0
    %694 = vmatpush1.bf16.msra.mxu0 0
    %695 = vmatprep.subr.bf16.mxu0 0
    %696 = vmatpush1.bf16.msra.mxu0 0
    %697 = vmatprep.subr.bf16.mxu0 0
    %698 = vmatpush1.bf16.msra.mxu0 0
    %699 = vmatprep.subr.bf16.mxu0 0
    %700 = vmatpush1.bf16.msra.mxu0 0
    %701 = vmatprep.subr.bf16.mxu0 0
    %702 = vmatpush1.bf16.msra.mxu0 0
    %703 = vmatprep.subr.bf16.mxu0 0
    %704 = vmatpush1.bf16.msra.mxu0 0
    %705 = vmatprep.subr.bf16.mxu0 0
    %706 = vmatpush1.bf16.msra.mxu0 0
    %707 = vmatprep.subr.bf16.mxu0 0
    %708 = vmatpush1.bf16.msra.mxu0 0
    %709 = vmatprep.subr.bf16.mxu0 0
    %710 = vmatpush1.bf16.msra.mxu0 0
    %711 = vmatprep.subr.bf16.mxu0 0
    %712 = vmatpush1.bf16.msra.mxu0 0
    %713 = vmatprep.subr.bf16.mxu0 0
    %714 = vmatpush1.bf16.msra.mxu0 0
    %715 = vmatprep.subr.bf16.mxu0 0
    %716 = vmatpush1.bf16.msra.mxu0 0
    %717 = vmatprep.mubr.bf16.mxu0 0
    %718 = vmatmul.mubr.bf16.gmra.mrb[0].mxu0 %v286
    %v719 = vpop.f32.mrb[0].mxu0
    %v720 = vadd.f32 0.0, %v719
    %v721 = vpop.f32.mrb[0].mxu0
    %v722 = vpop.f32.mrb[0].mxu0
    %v723 = vpop.f32.mrb[0].mxu0
    %724 = vdwg.mxu0
    %v726 = vrot.slane %v562, 6
    %v729 = vrot.slane %v616, 4
    %v732 = vrot.slane %v670, 2
    %v734 = vsel %vm57, %v506, %v726
    %v735 = vsel %vm109, %v734, %v729
    %v736 = vsel %vm119, %v735, %v732
    %v737 = vadd.f32 %v736, %v345
    %v738 = vadd.f32 %v720, %v350
    %v739 = vmax.f32 %v737, 0.0
    %v740 = vmax.f32 %v738, 0.0
    %v742 = vsel %vm57, %v740, 0
    %744 = vmatprep.subr.mxu0 0.0
    %745 = vmatpush1.msra.mxu0 %v739
    %746 = vmatprep.subr.mxu0 0.0
    %747 = vmatpush1.msra.mxu0 %v742
    %748 = vmatprep.subr.mxu0 0.0
    %749 = vmatpush1.msra.mxu0 0.0
    %750 = vmatprep.subr.mxu0 0.0
    %751 = vmatpush1.msra.mxu0 0.0
    %752 = vmatprep.subr.mxu0 0.0
    %753 = vmatpush1.msra.mxu0 0.0
    %754 = vmatprep.subr.mxu0 0.0
    %755 = vmatpush1.msra.mxu0 0.0
    %756 = vmatprep.subr.mxu0 0.0
    %757 = vmatpush1.msra.mxu0 0.0
    %758 = vmatprep.subr.mxu0 0.0
    %759 = vmatpush1.msra.mxu0 0.0
    %760 = vmatprep.subr.mxu0 0.0
    %761 = vmatpush1.msra.mxu0 0.0
    %762 = vmatprep.subr.mxu0 0.0
    %763 = vmatpush1.msra.mxu0 0.0
    %764 = vmatprep.subr.mxu0 0.0
    %765 = vmatpush1.msra.mxu0 0.0
    %766 = vmatprep.subr.mxu0 0.0
    %767 = vmatpush1.msra.mxu0 0.0
    %768 = vmatprep.subr.mxu0 0.0
    %769 = vmatpush1.msra.mxu0 0.0
    %770 = vmatprep.subr.mxu0 0.0
    %771 = vmatpush1.msra.mxu0 0.0
    %772 = vmatprep.subr.mxu0 0.0
    %773 = vmatpush1.msra.mxu0 0.0
    %774 = vmatprep.subr.mxu0 0.0
    %775 = vmatpush1.msra.mxu0 0.0
    %776 = vmatprep.subr.mxu0 0.0
    %777 = vmatpush1.msra.mxu0 0.0
    %778 = vmatprep.subr.mxu0 0.0
    %779 = vmatpush1.msra.mxu0 0.0
    %780 = vmatprep.subr.mxu0 0.0
    %781 = vmatpush1.msra.mxu0 0.0
    %782 = vmatprep.subr.mxu0 0.0
    %783 = vmatpush1.msra.mxu0 0.0
    %784 = vmatprep.subr.mxu0 0.0
    %785 = vmatpush1.msra.mxu0 0.0
    %786 = vmatprep.subr.mxu0 0.0
    %787 = vmatpush1.msra.mxu0 0.0
    %788 = vmatprep.subr.mxu0 0.0
    %789 = vmatpush1.msra.mxu0 0.0
    %790 = vmatprep.subr.mxu0 0.0
    %791 = vmatpush1.msra.mxu0 0.0
    %792 = vmatprep.subr.mxu0 0.0
    %793 = vmatpush1.msra.mxu0 0.0
    %794 = vmatprep.subr.mxu0 0.0
    %795 = vmatpush1.msra.mxu0 0.0
    %796 = vmatprep.subr.mxu0 0.0
    %797 = vmatpush1.msra.mxu0 0.0
    %798 = vmatprep.subr.mxu0 0.0
    %799 = vmatpush1.msra.mxu0 0.0
    %800 = vmatprep.subr.mxu0 0.0
    %801 = vmatpush1.msra.mxu0 0.0
    %802 = vmatprep.subr.mxu0 0.0
    %803 = vmatpush1.msra.mxu0 0.0
    %804 = vmatprep.subr.mxu0 0.0
    %805 = vmatpush1.msra.mxu0 0.0
    %806 = vmatprep.subr.mxu0 0.0
    %807 = vmatpush1.msra.mxu0 0.0
    %808 = vmatprep.mubr.f32.mxu0 0.0
    %809 = vmatmul.mubr.f32.gmra.mrb[0].mxu0 %v358
    %v810 = vpop.f32.mrb[0].mxu0
    %v811 = vadd.f32 0.0, %v810
    %v812 = vpop.f32.mrb[0].mxu0
    %813 = vdwg.mxu0
    %v814 = vxor.u32 %v811, 2147483648
    %v815 = vmul.f32 %v814, 1.442695
    %v816 = vpow.pop %v815
    %v817 = vadd.f32 %v816, 1.0
    %v818 = vrcp.pop %v817
    %v819 = vmul.f32 1.0, %v818
    %v820 = vunpack.c.l.bf16 %v451
    %v821 = vadd.f32 %v819, 1.0
    %v822 = vlaneseq
    %v823 = vshrl.u32 %v822, 7
    %v824 = vsub.s32 0, %v823
    %v825 = vrot.slane %v821, %v824
    %v826 = vmul.f32 %v820, %v825
    %s827 = scalar_lea.vmem [#allocation2], 4
    %828 = vst.msk [vmem:[%s827] sm:$0xf] %vm446, %v826
    %s829 = scalar_lea.vmem [#allocation4], 1
    %830 = vst.msk [vmem:[%s829] sm:$0x1] %vm448, %v819
    // Predicated region
    $region22: #{tpu_custom_call.1} parent=1 // pred_check
      _
    $region23: #{tpu_custom_call.1} parent=1 // pred_check_branch
      %832 = sbr.rel (0) target = $region25
    $region24: #{tpu_custom_call.1} parent=1 // pred_region
      %s834 = ssub.s32 128, 128
      %835 = vsyncadd [#allocation3], %s834
      %s836 = sshll.u32 [#allocation2], 4
      %s837 = int_to_ptr.vmem [resolvable:$true] %s836
      %842 = dma.vmem_to_hbm [thread:$0]  %s837, 128, %s5, [#allocation3], 64, 64, 4
    $region25: #{tpu_custom_call.1} parent=1 // pred_fallthru
      _
    // Predicated region
    $region26: #{tpu_custom_call.1} parent=1 // pred_check
      _
    $region27: #{tpu_custom_call.1} parent=1 // pred_check_branch
      %844 = sbr.rel (0) target = $region29
    $region28: #{tpu_custom_call.1} parent=1 // pred_region
      %s846 = ssub.s32 32, 32
      %847 = vsyncadd [#allocation5], %s846
      %s848 = sshll.u32 [#allocation4], 4
      %s849 = int_to_ptr.vmem [resolvable:$true] %s848
      %854 = dma.vmem_to_hbm [thread:$0]  %s849, 32, %s6, [#allocation5], 16, 16, 1
    $region29: #{tpu_custom_call.1} parent=1 // pred_fallthru
      _
    // Predicated region
    $region30: #{tpu_custom_call.1} parent=1 // pred_check
      _
    $region31: #{tpu_custom_call.1} parent=1 // pred_check_branch
      %856 = sbr.rel (0) target = $region33
    $region32: #{tpu_custom_call.1} parent=1 // pred_region
      %857 = dma.done [#allocation3], 128
    $region33: #{tpu_custom_call.1} parent=1 // pred_fallthru
      _
    // Predicated region
    $region34: #{tpu_custom_call.1} parent=1 // pred_check
      _
    $region35: #{tpu_custom_call.1} parent=1 // pred_check_branch
      %859 = sbr.rel (0) target = $region37
    $region36: #{tpu_custom_call.1} parent=1 // pred_region
      %860 = dma.done [#allocation5], 32
    $region37: #{tpu_custom_call.1} parent=1 // pred_fallthru
      _
    %861 = vsyncpa [#allocation3], 1
    %862 = vsyncpa [#allocation5], 1

</llo_original>
